<compile_context>
chip_gen: v5e
topology: v5e:2x2
jax: 0.10.0
libtpu: 0.0.40
codegen_flags: <defaults>
</compile_context>

<pallas_src>
import functools

import jax
import jax.numpy as jnp
from jax.experimental import pallas as pl
from jax.experimental.pallas import tpu as pltpu

_LANE = 128
_MIB = 1024 * 1024


def _relu_kernel(x_ref, o_ref):
    # Elementwise max(x, 0) on the current VMEM tile (trivial VPU work; the
    # weak-typed 0 preserves the input dtype, NaNs propagate like torch.relu).
    o_ref[...] = jnp.maximum(x_ref[...], 0)


@functools.lru_cache(maxsize=None)
def _tpu_budget():
    """(target_block_bytes, vmem_limit_bytes) tuned per TPU generation."""
    try:
        vmem = int(getattr(pltpu.get_tpu_info(), "vmem_capacity_bytes", 128 * _MIB))
    except Exception:  # pragma: no cover - be robust off-TPU / older runtimes
        vmem = 128 * _MIB
    if vmem < 96 * _MIB:
        # v7x: 64 MiB per-TC VMEM but ~3.2 TB/s HBM -> 8 MiB blocks halve the
        # ~0.35 us per-grid-step overhead.  4 buffers (in+out, double-buffered)
        # x 8 MiB = 32 MiB; 40 MiB scoped limit leaves headroom under 64 MiB.
        return 8 * _MIB, 40 * _MIB
    # v5e / v6e (128 MiB physical VMEM): 4 MiB blocks already sit at ~85% of
    # the HBM roofline.  Keep the explicit 32 MiB scoped limit (v5e's default
    # scoped VMEM is only 16 MiB and would otherwise overflow).
    return 4 * _MIB, 32 * _MIB


def _pick_width(n):
    """Widest lane-dense W dividing n (n must be a multiple of 128)."""
    for cand in (4096, 2048, 1024, 512, 256):
        if n % cand == 0:
            return cand
    return _LANE


def _relu_slab(slab, *, block_bytes, vmem_limit):
    """ReLU over a (R, W) slab; W is a multiple of 128."""
    R, W = slab.shape
    itemsize = jnp.dtype(slab.dtype).itemsize
    # Sublane packing: 8 rows/vreg for 32-bit, 16 for bf16, 32 for int8/fp8.
    sub = max(8, 32 // itemsize)

    max_rows = max(sub, (block_bytes // (W * itemsize)) // sub * sub)
    slab_bytes = R * W * itemsize

    if R > max_rows:
        # Big slab: full-size blocks; the ragged last block (if BR does not
        # divide R) is handled by Pallas with masked stores, so no divisor
        # search / no degeneration to tiny blocks.
        br = max_rows
    elif R >= 2 * sub and slab_bytes > 1 * _MIB:
        # Moderate slab: split into >= 2 blocks so the DMA pipeline overlaps
        # and (on v7x) both TensorCores get work.
        br = min(R, max(sub, pl.cdiv(pl.cdiv(R, 2), sub) * sub))
    else:
        # Small slab: one block (block dim == full array dim is always legal).
        br = R

    grid = (pl.cdiv(R, br),)

    # TODO(synk): if profiling shows exposed DMA-start gaps at very large
    # grids, add pipeline_mode=pl.Buffered(3) on the input BlockSpec.
    return pl.pallas_call(
        _relu_kernel,
        out_shape=jax.ShapeDtypeStruct((R, W), slab.dtype),
        grid=grid,
        in_specs=[pl.BlockSpec((br, W), lambda i: (i, 0))],
        out_specs=pl.BlockSpec((br, W), lambda i: (i, 0)),
        compiler_params=pltpu.CompilerParams(
            dimension_semantics=("parallel",),
            vmem_limit_bytes=vmem_limit,
        ),
    )(slab)


def relu_pallas(x: jax.Array) -> jax.Array:
    """ReLU(x) for arbitrary-shaped x, computed with a Pallas TPU kernel."""
    orig_shape = x.shape
    n = x.size
    if n == 0:
        return x

    block_bytes, vmem_limit = _tpu_budget()
    flat = x.reshape(-1)  # contiguous reshape: free under jit

    rem = n % _LANE
    if rem == 0:
        w = _pick_width(n)
        out = _relu_slab(
            flat.reshape(n // w, w), block_bytes=block_bytes, vmem_limit=vmem_limit
        )
        return out.reshape(orig_shape)

    # Ragged size: kernel on the 128-aligned prefix, plain elementwise max on
    # the (<128-element) tail.  Avoids the full-array pad and trailing-slice
    # HBM round trips of the previous fallback.
    prefix_n = n - rem
    tail = jnp.maximum(flat[prefix_n:], 0)
    if prefix_n == 0:
        return tail.reshape(orig_shape)
    w = _pick_width(prefix_n)
    prefix = _relu_slab(
        flat[:prefix_n].reshape(prefix_n // w, w),
        block_bytes=block_bytes,
        vmem_limit=vmem_limit,
    )
    return jnp.concatenate([prefix.reshape(-1), tail]).reshape(orig_shape)


if __name__ == "__main__":
    relu = jax.jit(relu_pallas)

    # NCHW input, same convention as the PyTorch module would receive.
    x = jax.random.normal(jax.random.PRNGKey(0), (2, 4, 16, 16), dtype=jnp.float32)
    y = jax.block_until_ready(relu(x))
    assert y.shape == x.shape and y.dtype == x.dtype
    assert jnp.allclose(y, jnp.maximum(x, 0.0)), "Pallas ReLU mismatch (main path)"

    # 525 elements = 4*128 + 13: exercises the prefix-kernel + tail path.
    x2 = jax.random.normal(jax.random.PRNGKey(1), (3, 5, 5, 7), dtype=jnp.float32)
    y2 = jax.block_until_ready(relu(x2))
    assert jnp.allclose(y2, jnp.maximum(x2, 0.0)), "Pallas ReLU mismatch (ragged path)"

    # Tiny (<128 elements): pure elementwise path.
    x3 = jax.random.normal(jax.random.PRNGKey(2), (3, 5, 7), dtype=jnp.float32)
    y3 = jax.block_until_ready(relu(x3))
    assert jnp.allclose(y3, jnp.maximum(x3, 0.0)), "Pallas ReLU mismatch (tiny path)"

    # bf16 (different sublane packing).
    x4 = jax.random.normal(jax.random.PRNGKey(3), (8, 256), dtype=jnp.bfloat16)
    y4 = jax.block_until_ready(relu(x4))
    assert y4.dtype == x4.dtype
    assert jnp.array_equal(y4, jnp.maximum(x4, 0)), "Pallas ReLU mismatch (bf16 path)"

    print("KERNEL_OK")
</pallas_src>

<mosaic_0001>
module attributes {stable_mosaic.version = 11 : i64} {
  func.func @_relu_kernel(%arg0: i32, %arg1: memref<1x2048xf32, #tpu.memory_space<vmem>>, %arg2: memref<1x2048xf32, #tpu.memory_space<vmem>>) attributes {dimension_semantics = [#tpu.dimension_semantics<parallel>], iteration_bounds = array<i64: 1>, scalar_prefetch = 0 : i64, scratch_operands = 0 : i64, tpu.core_type = #tpu.core_type<tc>, window_params = [{transform_indices = @transform_0, window_bounds = array<i64: 1, 2048>}, {transform_indices = @transform_1, window_bounds = array<i64: 1, 2048>}]} {
    %c0 = arith.constant 0 : index
    %c0_0 = arith.constant 0 : index
    %0 = vector.load %arg1[%c0, %c0_0] : memref<1x2048xf32, #tpu.memory_space<vmem>>, vector<1x2048xf32>
    %cst = arith.constant 0.000000e+00 : f32
    %1 = vector.broadcast %cst : f32 to vector<1x2048xf32>
    %2 = arith.maximumf %0, %1 : vector<1x2048xf32>
    %c0_1 = arith.constant 0 : index
    %c0_2 = arith.constant 0 : index
    %3 = vector.load %arg2[%c0_1, %c0_2] : memref<1x2048xf32, #tpu.memory_space<vmem>>, vector<1x2048xf32>
    tpu.vector_store %arg2[%c0_1, %c0_2], %2 {strides = array<i32>} : memref<1x2048xf32, #tpu.memory_space<vmem>>, vector<1x2048xf32>,
    return
  }
  func.func @transform_0(%arg0: i32) -> (i32, i32) {
    %c0_i32 = arith.constant 0 : i32
    %c0_i32_0 = arith.constant 0 : i32
    return %arg0, %c0_i32 : i32, i32
  }
  func.func @transform_1(%arg0: i32) -> (i32, i32) {
    %c0_i32 = arith.constant 0 : i32
    %c0_i32_0 = arith.constant 0 : i32
    return %arg0, %c0_i32 : i32, i32
  }
}

</mosaic_0001>

<llo_original>
// kernel: relu_pallas.1
$region0: #{relu_pallas.1}
  #allocation0 [shape = 'u32[]', space=smem, size = 0x4, offset = 0x4, fixed_abs, tag = 'smem constant byte address 0x4 - core index']
  #allocation1 [shape = 'u32[72,128]{1,0:T(1,128)}', space=vmem, size = 0x9000, scoped, tag = 'internal scratch']
  %s0 = inlined_call_operand.vmem [shape: f32[1,2048], index: 0, kind: input, shape index: {}]
  %s1 = inlined_call_operand.vmem [shape: f32[1,2048], index: 1, kind: output, shape index: {}]
  %s2 = sld [smem:[#allocation0]]
  $region14: #{relu_pallas.1} parent=0
    _
  %s4 = ssub.s32 1, %s2
  %s5 = scalar_select 0, %s4, %s2
  // Predicated region
  $region2: #{relu_pallas.1} parent=0 // pred_check
    _
  $region3: #{relu_pallas.1} parent=0 // pred_check_branch
    %7 = sbr.rel (0) target = $region5
  $region4: #{relu_pallas.1} parent=0 // pred_region
    _
  $region5: #{relu_pallas.1} parent=0 // pred_fallthru
    _
  %v8 = vld [vmem:[%s0] sm:$0xff]
  %v9 = vld [vmem:[%s0 + $0x8] sm:$0xff]
  %v10 = vmax.f32 %v8, 0.0
  %v11 = vmax.f32 %v9, 0.0
  %12 = vst [vmem:[%s1] sm:$0xff] %v10
  %13 = vst [vmem:[%s1 + $0x8] sm:$0xff] %v11
  // Predicated region
  $region6: #{relu_pallas.1} parent=0 // pred_check
    _
  $region7: #{relu_pallas.1} parent=0 // pred_check_branch
    %15 = sbr.rel (0) target = $region9
  $region8: #{relu_pallas.1} parent=0 // pred_region
    _
  $region9: #{relu_pallas.1} parent=0 // pred_fallthru
    _
  // Predicated region
  $region10: #{relu_pallas.1} parent=0 // pred_check
    _
  $region11: #{relu_pallas.1} parent=0 // pred_check_branch
    %17 = sbr.rel (0) target = $region13
  $region12: #{relu_pallas.1} parent=0 // pred_region
    _
  $region13: #{relu_pallas.1} parent=0 // pred_fallthru
    _

</llo_original>
